<compile_context>
chip_gen: v7x
topology: tpu7x:2x2x1
jax: 0.10.0
libtpu: 0.0.40
codegen_flags: <defaults>
</compile_context>

<pallas_src>
import functools
import math

import jax
import jax.numpy as jnp
from jax import lax
from jax.experimental import pallas as pl
from jax.experimental.pallas import tpu as pltpu

LANES = 128
SUBLANES = 8
ELEMS_PER_VREG = SUBLANES * LANES        # 1024
TARGET_BLOCK_ROWS = 4096                 # 4096 * 128 * 4 B = 2 MiB / f32 block
NUM_CORES = 2                            # v7x has 2 TCs; harmless elsewhere


def _pick_chunk_rows(block_rows):
    """Largest power-of-two chunk (<= 512 rows) that divides block_rows."""
    for cand in (512, 256, 128, 64, 32, 16, 8):
        if block_rows % cand == 0:
            return cand
    return block_rows  # unreachable: block_rows is always a multiple of 8


# --------------------------------------------------------------------------
# Kernels
# --------------------------------------------------------------------------
def _relmse_reduce_kernel(a_ref, b_ref, out_ref, *, eps, rows, block_rows,
                          chunk_rows, num_tiles, tiles_per_core, needs_mask,
                          unroll):
    c = pl.program_id(0)                 # core slot ("parallel" axis)
    i = pl.program_id(1)                 # tile within the core ("arbitrary")
    t = c * tiles_per_core + i           # global block index (unclamped)

    @pl.when(i == 0)
    def _():
        out_ref[...] = jnp.zeros_like(out_ref)

    n_chunks = block_rows // chunk_rows

    def _accumulate(masked):
        def body(j, carry):
            start = pl.multiple_of(j * chunk_rows, chunk_rows)
            a = a_ref[pl.ds(start, chunk_rows), :].astype(jnp.float32)
            b = b_ref[pl.ds(start, chunk_rows), :].astype(jnp.float32)
            diff = a - b
            d = (diff * diff) / (a * a + jnp.float32(eps))
            if masked:
                # Row-only mask: kills Pallas boundary-block garbage and the
                # fully-duplicated overflow block of the short core.
                row = lax.broadcasted_iota(jnp.int32, d.shape, 0)
                grow = t * block_rows + j * chunk_rows + row
                d = jnp.where(grow < rows, d, jnp.float32(0.0))
            # VPU-only running sum into the resident (1,8,128) output block.
            out_ref[0] += jnp.sum(
                d.reshape(chunk_rows // SUBLANES, SUBLANES, LANES), axis=0)
            return carry

        lax.fori_loop(0, n_chunks, body, 0, unroll=unroll)

    if needs_mask:
        @pl.when(t >= num_tiles - 1)
        def _():
            _accumulate(masked=True)

        @pl.when(t < num_tiles - 1)
        def _():
            _accumulate(masked=False)
    else:
        _accumulate(masked=False)


def _relmse_pointwise_kernel(a_ref, b_ref, o_ref, *, eps):
    a = a_ref[...].astype(jnp.float32)
    b = b_ref[...].astype(jnp.float32)
    diff = a - b
    o_ref[...] = ((diff * diff) / (a * a + jnp.float32(eps))).astype(o_ref.dtype)


# --------------------------------------------------------------------------
# Wrapper
# --------------------------------------------------------------------------
def _bulk_slab(flat, n_bulk, n_tail):
    rows = n_bulk // LANES
    if n_tail == 0:
        return flat.reshape(rows, LANES)          # pure bitcast, zero-copy
    return flat[:n_bulk].reshape(rows, LANES)


def _tail_values(flat_a, flat_b, n_bulk, eps):
    at = flat_a[n_bulk:].astype(jnp.float32)
    bt = flat_b[n_bulk:].astype(jnp.float32)
    diff = at - bt
    return (diff * diff) / (at * at + jnp.float32(eps))


def rel_mse_loss(inp, target, eps=1e-4, size_average=True, reduce=True):
    """Pallas implementation of RelMSELoss.forward(input, target)."""
    eps = float(eps)
    n = math.prod(inp.shape)
    orig_shape = inp.shape
    flat_a = inp.reshape(-1)
    flat_b = target.reshape(-1)
    n_bulk = (n // ELEMS_PER_VREG) * ELEMS_PER_VREG
    n_tail = n - n_bulk

    if not reduce:
        # Elementwise map (no reduction), output in the input dtype.
        pieces = []
        if n_bulk > 0:
            rows = n_bulk // LANES
            a2d = _bulk_slab(flat_a, n_bulk, n_tail)
            b2d = _bulk_slab(flat_b, n_bulk, n_tail)
            block_rows = min(TARGET_BLOCK_ROWS, rows)
            num_tiles = pl.cdiv(rows, block_rows)
            out2d = pl.pallas_call(
                functools.partial(_relmse_pointwise_kernel, eps=eps),
                out_shape=jax.ShapeDtypeStruct((rows, LANES), inp.dtype),
                grid=(num_tiles,),
                in_specs=[pl.BlockSpec((block_rows, LANES), lambda i: (i, 0)),
                          pl.BlockSpec((block_rows, LANES), lambda i: (i, 0))],
                out_specs=pl.BlockSpec((block_rows, LANES), lambda i: (i, 0)),
                compiler_params=pltpu.CompilerParams(
                    dimension_semantics=("parallel",)),
            )(a2d, b2d)
            pieces.append(out2d.reshape(-1))
        if n_tail > 0:
            pieces.append(
                _tail_values(flat_a, flat_b, n_bulk, eps).astype(inp.dtype))
        out_flat = pieces[0] if len(pieces) == 1 else jnp.concatenate(pieces)
        return out_flat.reshape(orig_shape)

    # Reducing path (default): mean (size_average=True) or sum.
    inv_count = (1.0 / n) if size_average else 1.0
    total = jnp.float32(0.0)

    if n_bulk > 0:
        rows = n_bulk // LANES                    # multiple of 8
        a2d = _bulk_slab(flat_a, n_bulk, n_tail)
        b2d = _bulk_slab(flat_b, n_bulk, n_tail)
        block_rows = min(TARGET_BLOCK_ROWS, rows)
        chunk_rows = _pick_chunk_rows(block_rows)
        num_tiles = pl.cdiv(rows, block_rows)
        num_cores = NUM_CORES if num_tiles >= NUM_CORES else 1
        tiles_per_core = pl.cdiv(num_tiles, num_cores)
        needs_mask = (rows % block_rows != 0) or (
            num_cores * tiles_per_core != num_tiles)
        unroll = (block_rows // chunk_rows) <= 8

        def in_map(c, i):
            # Clamp so the short core's overflow step re-reads a valid block;
            # its contribution is fully masked in-kernel.
            return (jnp.minimum(c * tiles_per_core + i, num_tiles - 1), 0)

        partials = pl.pallas_call(
            functools.partial(
                _relmse_reduce_kernel, eps=eps, rows=rows,
                block_rows=block_rows, chunk_rows=chunk_rows,
                num_tiles=num_tiles, tiles_per_core=tiles_per_core,
                needs_mask=needs_mask, unroll=unroll),
            out_shape=jax.ShapeDtypeStruct((num_cores, SUBLANES, LANES),
                                           jnp.float32),
            grid=(num_cores, tiles_per_core),
            in_specs=[pl.BlockSpec((block_rows, LANES), in_map),
                      pl.BlockSpec((block_rows, LANES), in_map)],
            out_specs=pl.BlockSpec((1, SUBLANES, LANES),
                                   lambda c, i: (c, 0, 0)),
            compiler_params=pltpu.CompilerParams(
                dimension_semantics=("parallel", "arbitrary")),
        )(a2d, b2d)
        total = total + jnp.sum(partials)

    if n_tail > 0:
        total = total + jnp.sum(_tail_values(flat_a, flat_b, n_bulk, eps))

    return total * jnp.float32(inv_count)


def rel_mse_loss_ref(inp, target, eps=1e-4, size_average=True, reduce=True):
    a = inp.astype(jnp.float32)
    b = target.astype(jnp.float32)
    d = (a - b) ** 2 / (a ** 2 + eps)
    if not reduce:
        return d.astype(inp.dtype)
    return jnp.mean(d) if size_average else jnp.sum(d)


if __name__ == "__main__":
    key = jax.random.PRNGKey(0)
    k1, k2, k3, k4, k5, k6 = jax.random.split(key, 6)

    # Primary small NCHW example, consistent with an image-to-image loss.
    x = jax.random.normal(k1, (2, 4, 16, 16), dtype=jnp.float32)
    y = jax.random.normal(k2, (2, 4, 16, 16), dtype=jnp.float32)

    out = jax.block_until_ready(rel_mse_loss(x, y))            # eps=1e-4, mean
    ref = rel_mse_loss_ref(x, y)
    assert jnp.allclose(out, ref, rtol=1e-4, atol=1e-6), (out, ref)

    # sum-reduction path.
    out_sum = jax.block_until_ready(rel_mse_loss(x, y, size_average=False))
    ref_sum = rel_mse_loss_ref(x, y, size_average=False)
    assert jnp.allclose(out_sum, ref_sum, rtol=1e-4, atol=1e-4), (out_sum, ref_sum)

    # no-reduce (elementwise) path: dtype must match the input.
    out_pw = jax.block_until_ready(rel_mse_loss(x, y, reduce=False))
    ref_pw = rel_mse_loss_ref(x, y, reduce=False)
    assert out_pw.shape == x.shape and out_pw.dtype == x.dtype
    assert jnp.allclose(out_pw, ref_pw, rtol=1e-5, atol=1e-6)

    # Odd-sized input: exercises the plain-JAX tail fold (n % 1024 != 0).
    x2 = jax.random.normal(k3, (3, 5, 17, 19), dtype=jnp.float32)
    y2 = jax.random.normal(k4, (3, 5, 17, 19), dtype=jnp.float32)
    out2 = jax.block_until_ready(rel_mse_loss(x2, y2))
    ref2 = rel_mse_loss_ref(x2, y2)
    assert jnp.allclose(out2, ref2, rtol=1e-4, atol=1e-6), (out2, ref2)
    out2_pw = jax.block_until_ready(rel_mse_loss(x2, y2, reduce=False))
    assert jnp.allclose(out2_pw, rel_mse_loss_ref(x2, y2, reduce=False),
                        rtol=1e-5, atol=1e-6)

    # Multi-tile + 2-core grid + boundary-block row masking
    # (rows = 4800 -> block_rows = 4096, rows % block_rows != 0).
    x3 = jax.random.normal(k5, (4, 4, 300, 128), dtype=jnp.float32)
    y3 = jax.random.normal(k6, (4, 4, 300, 128), dtype=jnp.float32)
    out3 = jax.block_until_ready(rel_mse_loss(x3, y3))
    ref3 = rel_mse_loss_ref(x3, y3)
    assert jnp.allclose(out3, ref3, rtol=2e-4, atol=1e-5), (out3, ref3)

    # Odd tile count (num_tiles = 3 over 2 cores): exercises the clamped,
    # fully-masked duplicate block on the short core.
    kk1, kk2 = jax.random.split(k5)
    x4 = jax.random.normal(kk1, (4, 4, 256, 272), dtype=jnp.float32)
    y4 = jax.random.normal(kk2, (4, 4, 256, 272), dtype=jnp.float32)
    out4 = jax.block_until_ready(rel_mse_loss(x4, y4))
    ref4 = rel_mse_loss_ref(x4, y4)
    assert jnp.allclose(out4, ref4, rtol=2e-4, atol=1e-5), (out4, ref4)

    print("KERNEL_OK")
</pallas_src>

<mosaic_0001>
module attributes {stable_mosaic.version = 11 : i64} {
  func.func @_relmse_reduce_kernel(%arg0: i32, %arg1: i32, %arg2: memref<16x128xf32, #tpu.memory_space<vmem>>, %arg3: memref<16x128xf32, #tpu.memory_space<vmem>>, %arg4: memref<1x8x128xf32, #tpu.memory_space<vmem>>) attributes {dimension_semantics = [#tpu.dimension_semantics<parallel>, #tpu.dimension_semantics<arbitrary>], iteration_bounds = array<i64: 1, 1>, scalar_prefetch = 0 : i64, scratch_operands = 0 : i64, tpu.core_type = #tpu.core_type<tc>, window_params = [{transform_indices = @transform_0, window_bounds = array<i64: 16, 128>}, {transform_indices = @transform_1, window_bounds = array<i64: 16, 128>}, {transform_indices = @transform_2, window_bounds = array<i64: 1, 8, 128>}]} {
    %c0_i32 = arith.constant 0 : i32
    %0 = arith.cmpi eq, %arg1, %c0_i32 : i32
    %1 = arith.extui %0 : i1 to i32
    %c0_i32_0 = arith.constant 0 : i32
    %2 = arith.cmpi ne, %1, %c0_i32_0 : i32
    scf.if %2 {
      %cst_10 = arith.constant 0.000000e+00 : f32
      %23 = vector.broadcast %cst_10 : f32 to vector<1x8x128xf32>
      %c0_11 = arith.constant 0 : index
      %c0_12 = arith.constant 0 : index
      %c0_13 = arith.constant 0 : index
      %24 = vector.load %arg4[%c0_11, %c0_12, %c0_13] : memref<1x8x128xf32, #tpu.memory_space<vmem>>, vector<1x8x128xf32>
      tpu.vector_store %arg4[%c0_11, %c0_12, %c0_13], %23 {strides = array<i32>} : memref<1x8x128xf32, #tpu.memory_space<vmem>>, vector<1x8x128xf32>,
    } else {
    }
    %c0_i32_1 = arith.constant 0 : i32
    %c16_i32 = arith.constant 16 : i32
    %3 = arith.muli %c0_i32_1, %c16_i32 : i32
    %4 = tpu.assume_multiple %3, 16 : i32
    %5 = arith.index_cast %4 : i32 to index
    %c0 = arith.constant 0 : index
    %6 = vector.load %arg2[%5, %c0] : memref<16x128xf32, #tpu.memory_space<vmem>>, vector<16x128xf32>
    %7 = arith.index_cast %4 : i32 to index
    %c0_2 = arith.constant 0 : index
    %8 = vector.load %arg3[%7, %c0_2] : memref<16x128xf32, #tpu.memory_space<vmem>>, vector<16x128xf32>
    %9 = arith.subf %6, %8 : vector<16x128xf32>
    %10 = arith.mulf %9, %9 : vector<16x128xf32>
    %11 = arith.mulf %6, %6 : vector<16x128xf32>
    %cst = arith.constant 9.99999974E-5 : f32
    %12 = vector.broadcast %cst : f32 to vector<16x128xf32>
    %13 = arith.addf %11, %12 : vector<16x128xf32>
    %14 = arith.divf %10, %13 : vector<16x128xf32>
    %c0_3 = arith.constant 0 : index
    %c0_4 = arith.constant 0 : index
    %c0_5 = arith.constant 0 : index
    %15 = vector.load %arg4[%c0_3, %c0_4, %c0_5] : memref<1x8x128xf32, #tpu.memory_space<vmem>>, vector<1x8x128xf32>
    %16 = vector.shape_cast %15 : vector<1x8x128xf32> to vector<8x128xf32>
    %17 = vector.shape_cast %14 : vector<16x128xf32> to vector<2x8x128xf32>
    %cst_6 = arith.constant dense<0.000000e+00> : vector<8x128xf32>
    %18 = vector.multi_reduction <add>, %17, %cst_6 [0] : vector<2x8x128xf32> to vector<8x128xf32>
    %19 = arith.addf %16, %18 : vector<8x128xf32>
    %c0_7 = arith.constant 0 : index
    %c0_8 = arith.constant 0 : index
    %c0_9 = arith.constant 0 : index
    %20 = vector.load %arg4[%c0_7, %c0_8, %c0_9] : memref<1x8x128xf32, #tpu.memory_space<vmem>>, vector<1x8x128xf32>
    %21 = vector.shape_cast %20 : vector<1x8x128xf32> to vector<8x128xf32>
    %22 = vector.shape_cast %19 : vector<8x128xf32> to vector<1x8x128xf32>
    tpu.vector_store %arg4[%c0_7, %c0_8, %c0_9], %22 {strides = array<i32>} : memref<1x8x128xf32, #tpu.memory_space<vmem>>, vector<1x8x128xf32>,
    %c1_i32 = arith.constant 1 : i32
    return
  }
  func.func @transform_0(%arg0: i32, %arg1: i32) -> (i32, i32) {
    %c1_i32 = arith.constant 1 : i32
    %0 = arith.muli %arg0, %c1_i32 : i32
    %1 = arith.addi %0, %arg1 : i32
    %c0_i32 = arith.constant 0 : i32
    %2 = arith.minsi %1, %c0_i32 : i32
    %c0_i32_0 = arith.constant 0 : i32
    %c0_i32_1 = arith.constant 0 : i32
    return %2, %c0_i32_0 : i32, i32
  }
  func.func @transform_1(%arg0: i32, %arg1: i32) -> (i32, i32) {
    %c1_i32 = arith.constant 1 : i32
    %0 = arith.muli %arg0, %c1_i32 : i32
    %1 = arith.addi %0, %arg1 : i32
    %c0_i32 = arith.constant 0 : i32
    %2 = arith.minsi %1, %c0_i32 : i32
    %c0_i32_0 = arith.constant 0 : i32
    %c0_i32_1 = arith.constant 0 : i32
    return %2, %c0_i32_0 : i32, i32
  }
  func.func @transform_2(%arg0: i32, %arg1: i32) -> (i32, i32, i32) {
    %c0_i32 = arith.constant 0 : i32
    %c0_i32_0 = arith.constant 0 : i32
    %c0_i32_1 = arith.constant 0 : i32
    return %arg0, %c0_i32, %c0_i32_0 : i32, i32, i32
  }
}

</mosaic_0001>

<llo_original>
// kernel: tpu_custom_call.1
$region0: #{tpu_custom_call.1}
  #allocation0 [shape = 'u32[]', space=smem, size = 0x4, offset = 0x4, fixed_abs, tag = 'smem constant byte address 0x4 - core index']
  #allocation1 [shape = 'u32[144,128]{1,0:T(1,128)}', space=vmem, size = 0x12000, scoped, tag = 'internal scratch']
  %s0 = inlined_call_operand.hbm [shape: f32[16,128], index: 0, kind: input, shape index: {}]
  %s1 = inlined_call_operand.hbm [shape: f32[16,128], index: 1, kind: input, shape index: {}]
  %s2 = inlined_call_operand.hbm [shape: f32[1,8,128], index: 2, kind: output, shape index: {}]
  %s3 = sld [smem:[#allocation0]]
  $region30: #{tpu_custom_call.1} parent=0
    _
  %s5 = ssub.s32 1, %s3
  %s6 = scalar_select 0, %s5, %s3
  $region1: #{tpu_custom_call.1} parent=0
    #allocation2 [shape = 'u8[8192]{0}', space=vmem, size = 0x2000, scoped, tag = 'input window, operand 0, single buffered']
    #allocation3 [shape = 's32[1]{0}', space=sflag, size = 0x4, scoped, tag = 'scoped memory for tpu_custom_call.1']
    #allocation4 [shape = 's32[1]{0}', space=sflag, size = 0x4, scoped, tag = 'scoped memory for tpu_custom_call.1']
    #allocation5 [shape = 'u8[8192]{0}', space=vmem, size = 0x2000, scoped, tag = 'input window, operand 1, single buffered']
    #allocation6 [shape = 's32[1]{0}', space=sflag, size = 0x4, scoped, tag = 'scoped memory for tpu_custom_call.1']
    #allocation7 [shape = 'u8[4096]{0}', space=vmem, size = 0x1000, scoped, tag = 'output window, operand 0, single buffered']
    %7 = vsyncpa [#allocation3], 0
    %8 = vsyncpa [#allocation6], 0
    %9 = vsyncpa [#allocation4], 0
    // Predicated region
    $region2: #{tpu_custom_call.1} parent=1 // pred_check
      _
    $region3: #{tpu_custom_call.1} parent=1 // pred_check_branch
      %11 = sbr.rel (0) target = $region5
    $region4: #{tpu_custom_call.1} parent=1 // pred_region
      %s12 = sadd.s32 0, 0
      %p13 = scmp.lt.s32.totalorder %s12, 0
      %s14 = scalar_select %p13, %s12, 0
      %s15 = smul.u32 2, %s14
      %s17 = ssub.s32 256, 256
      %18 = vsyncadd [#allocation3], %s17
      %s19 = smul.addr %s15, 128
      %s20 = scalar_lea.hbm %s0, %s19
      %s21 = sshll.u32 [#allocation2], 4
      %s22 = int_to_ptr.vmem [resolvable:$true] %s21
      %27 = dma.hbm_to_vmem [thread:$0]  %s20, 256, %s22, [#allocation3], 128, 128, 8
    $region5: #{tpu_custom_call.1} parent=1 // pred_fallthru
      _
    // Predicated region
    $region6: #{tpu_custom_call.1} parent=1 // pred_check
      _
    $region7: #{tpu_custom_call.1} parent=1 // pred_check_branch
      %29 = sbr.rel (0) target = $region9
    $region8: #{tpu_custom_call.1} parent=1 // pred_region
      %s30 = sadd.s32 0, 0
      %p31 = scmp.lt.s32.totalorder %s30, 0
      %s32 = scalar_select %p31, %s30, 0
      %s33 = smul.u32 2, %s32
      %s35 = ssub.s32 256, 256
      %36 = vsyncadd [#allocation6], %s35
      %s37 = smul.addr %s33, 128
      %s38 = scalar_lea.hbm %s1, %s37
      %s39 = sshll.u32 [#allocation5], 4
      %s40 = int_to_ptr.vmem [resolvable:$true] %s39
      %45 = dma.hbm_to_vmem [thread:$0]  %s38, 256, %s40, [#allocation6], 128, 128, 8
    $region9: #{tpu_custom_call.1} parent=1 // pred_fallthru
      _
    // Predicated region
    $region10: #{tpu_custom_call.1} parent=1 // pred_check
      _
    $region11: #{tpu_custom_call.1} parent=1 // pred_check_branch
      %47 = sbr.rel (0) target = $region13
    $region12: #{tpu_custom_call.1} parent=1 // pred_region
      %48 = dma.done [#allocation3], 256
    $region13: #{tpu_custom_call.1} parent=1 // pred_fallthru
      _
    // Predicated region
    $region14: #{tpu_custom_call.1} parent=1 // pred_check
      _
    $region15: #{tpu_custom_call.1} parent=1 // pred_check_branch
      %50 = sbr.rel (0) target = $region17
    $region16: #{tpu_custom_call.1} parent=1 // pred_region
      %51 = dma.done [#allocation6], 256
    $region17: #{tpu_custom_call.1} parent=1 // pred_fallthru
      _
    %s52 = sadd.s32 0, 0
    %p53 = scmp.lt.s32.totalorder %s52, 0
    %s54 = scalar_select %p53, %s52, 0
    %s55 = smul.u32 2, %s54
    %s56 = sadd.s32 0, 0
    %p57 = scmp.lt.s32.totalorder %s56, 0
    %s58 = scalar_select %p57, %s56, 0
    %s59 = smul.u32 2, %s58
    %p60 = scmp.eq.s32.totalorder 0, 0
    // Predicated region
    $region18: #{tpu_custom_call.1} parent=1 // pred_check
      %p61 = pneg %p60
    $region19: #{tpu_custom_call.1} parent=1 // pred_check_branch
      %63 = sbr.rel (%p61) target = $region21
    $region20: #{tpu_custom_call.1} parent=1 // pred_region
      %64 = vst [vmem:[#allocation7] sm:$0xff] 0.0
    $region21: #{tpu_custom_call.1} parent=1 // pred_fallthru
      _
    %v65 = vld [vmem:[#allocation2] sm:$0xff]
    %v66 = vld [vmem:[#allocation2 + $0x8] sm:$0xff]
    %v67 = vld [vmem:[#allocation5] sm:$0xff]
    %v68 = vld [vmem:[#allocation5 + $0x8] sm:$0xff]
    %v69 = vsub.f32 %v65, %v67
    %v70 = vsub.f32 %v66, %v68
    %v71 = vmul.f32 %v69, %v69
    %v72 = vmul.f32 %v70, %v70
    %v73 = vmul.f32 %v65, %v65
    %v74 = vmul.f32 %v66, %v66
    %v75 = vadd.f32 %v73, 0.0001
    %v76 = vadd.f32 %v74, 0.0001
    %v77 = vrcp.pop %v75
    %v78 = vmul.f32 %v71, %v77
    %v79 = vrcp.pop %v76
    %v80 = vmul.f32 %v72, %v79
    %v81 = vld [vmem:[#allocation7] sm:$0xff]
    %v82 = vadd.f32 %v78, %v80
    %v83 = vadd.f32 %v81, %v82
    %84 = vst [vmem:[#allocation7] sm:$0xff] %v83
    // Predicated region
    $region22: #{tpu_custom_call.1} parent=1 // pred_check
      _
    $region23: #{tpu_custom_call.1} parent=1 // pred_check_branch
      %86 = sbr.rel (0) target = $region25
    $region24: #{tpu_custom_call.1} parent=1 // pred_region
      %s88 = ssub.s32 128, 128
      %89 = vsyncadd [#allocation4], %s88
      %s91 = sshll.u32 [#allocation7], 4
      %s92 = int_to_ptr.vmem [resolvable:$true] %s91
      %94 = dma.vmem_to_hbm [thread:$0]  %s92, 128, %s2, [#allocation4]
    $region25: #{tpu_custom_call.1} parent=1 // pred_fallthru
      _
    // Predicated region
    $region26: #{tpu_custom_call.1} parent=1 // pred_check
      _
    $region27: #{tpu_custom_call.1} parent=1 // pred_check_branch
      %96 = sbr.rel (0) target = $region29
    $region28: #{tpu_custom_call.1} parent=1 // pred_region
      %97 = dma.done [#allocation4], 128
    $region29: #{tpu_custom_call.1} parent=1 // pred_fallthru
      _
    %98 = vsyncpa [#allocation3], 1
    %99 = vsyncpa [#allocation6], 1
    %100 = vsyncpa [#allocation4], 1

</llo_original>
